<compile_context>
chip_gen: v6e
topology: v6e:2x2x1
jax: 0.10.0
libtpu: 0.0.40
codegen_flags: <defaults>
</compile_context>

<pallas_src>
import jax
import jax.numpy as jnp
from jax.experimental import pallas as pl
from jax.experimental.pallas import tpu as pltpu


def _per_pixel_kernel(x_ref, w_ref, b_ref, out_ref):
    # x_ref:   (R, HW_t)      R fused (n, c) rows of pixels (lane-dense)
    # w_ref:   (R, L, 1)      per-row 1x1-conv weights (one scalar per label)
    # b_ref:   (R, L, 1)      per-row biases
    # out_ref: (R, L, HW_t)   log-softmax(over L) of per-pixel logits
    R = x_ref.shape[0]
    for r in range(R):  # small static loop; keeps live set ~ (L, HW_t)
        x_row = x_ref[pl.ds(r, 1), :].astype(jnp.float32)    # (1, HW_t)
        w = w_ref[r].astype(jnp.float32)                      # (L, 1)
        b = b_ref[r].astype(jnp.float32)                      # (L, 1)

        # 1x1 conv with single input channel == per-pixel affine map (VPU).
        z = w * x_row + b                                     # (L, HW_t)

        # Numerically-stable log-softmax over the label (sublane) axis,
        # all in f32; cast only at the store.
        m = jnp.max(z, axis=0, keepdims=True)                 # (1, HW_t)
        lse = m + jnp.log(jnp.sum(jnp.exp(z - m), axis=0, keepdims=True))
        out_ref[r] = (z - lse).astype(out_ref.dtype)          # (L, HW_t)


def per_pixel_prediction_block(x, weight, bias, *, out_dtype=None,
                               row_block=8, max_hw_tile=4096):
    """
    x:      (N, C, H, W)   (NCHW, matching the PyTorch module)
    weight: (C, L)   conv_layers[i].weight.reshape(n_label,) for channel i
    bias:   (C, L)   conv_layers[i].bias for channel i
    returns (N, C, L, H, W) with log-softmax over the L axis.
    """
    N, C, H, W = x.shape
    Cw, L = weight.shape
    assert Cw == C and bias.shape == (C, L)
    out_dtype = x.dtype if out_dtype is None else out_dtype

    HW = H * W
    NC = N * C
    R = row_block

    # Pad fused row axis to a multiple of R.
    NC_pad = pl.cdiv(NC, R) * R

    # Lane tile: large multiple of 128, capped so per-row (L, HW_t) f32
    # intermediates stay register/VMEM friendly and blocks fit every
    # generation's VMEM budget (v7x 64 MiB included).
    hw_cap = max(128, (16384 // max(L, 1)) // 128 * 128)
    HW128 = pl.cdiv(HW, 128) * 128
    HW_t = min(max_hw_tile, hw_cap, HW128)
    HW_pad = pl.cdiv(HW, HW_t) * HW_t

    # x -> (NC_pad, HW_pad): pixels lane-dense, one row per (n, c).
    x2 = x.reshape(NC, HW)
    if NC_pad != NC or HW_pad != HW:
        x2 = jnp.pad(x2, ((0, NC_pad - NC), (0, HW_pad - HW)))

    # Per-row scalars: row r -> channel r % C. Shape (NC_pad, L, 1) so the
    # kernel slice w_ref[r] is already (L, 1) (no in-kernel relayout).
    w2 = jnp.tile(weight, (N, 1))
    b2 = jnp.tile(bias, (N, 1))
    if NC_pad != NC:
        w2 = jnp.pad(w2, ((0, NC_pad - NC), (0, 0)))
        b2 = jnp.pad(b2, ((0, NC_pad - NC), (0, 0)))
    w2 = w2.reshape(NC_pad, L, 1)
    b2 = b2.reshape(NC_pad, L, 1)

    grid = (NC_pad // R, HW_pad // HW_t)

    out = pl.pallas_call(
        _per_pixel_kernel,
        out_shape=jax.ShapeDtypeStruct((NC_pad, L, HW_pad), out_dtype),
        grid_spec=pltpu.PrefetchScalarGridSpec(
            num_scalar_prefetch=0,
            grid=grid,
            in_specs=[
                pl.BlockSpec((R, HW_t), lambda i, j: (i, j)),
                # w/b block index is constant over the fast (HW) grid axis ->
                # DMA'd only when the row block changes, resident otherwise.
                pl.BlockSpec((R, L, 1), lambda i, j: (i, 0, 0)),
                pl.BlockSpec((R, L, 1), lambda i, j: (i, 0, 0)),
            ],
            out_specs=pl.BlockSpec((R, L, HW_t), lambda i, j: (i, 0, j)),
        ),
        compiler_params=pltpu.CompilerParams(
            dimension_semantics=("parallel", "parallel")),
    )(x2, w2, b2)

    if NC_pad != NC or HW_pad != HW:
        out = out[:NC, :, :HW]
    return out.reshape(N, C, L, H, W)


def _reference(x, weight, bias):
    # Pure-JAX reference of the PyTorch forward pass.
    z = (weight[None, :, :, None, None] * x[:, :, None, :, :]
         + bias[None, :, :, None, None])              # (N, C, L, H, W)
    return jax.nn.log_softmax(z, axis=2)


if __name__ == "__main__":
    N, C, L, H, W = 2, 4, 8, 16, 16   # batch, input_nc, n_label, spatial

    key = jax.random.PRNGKey(0)
    kx, kw, kb = jax.random.split(key, 3)

    x = jax.random.normal(kx, (N, C, H, W), dtype=jnp.float32)
    # Conv2d(1, n_label, 1): one scalar weight + bias per label, per channel.
    weight = jax.random.uniform(kw, (C, L), jnp.float32, -1.0, 1.0)
    bias = jax.random.uniform(kb, (C, L), jnp.float32, -1.0, 1.0)

    out = jax.jit(per_pixel_prediction_block)(x, weight, bias)
    out = jax.block_until_ready(out)

    ref = _reference(x, weight, bias)
    assert out.shape == (N, C, L, H, W)
    assert jnp.allclose(out, ref, atol=1e-5, rtol=1e-5)

    print("KERNEL_OK")
</pallas_src>

<mosaic_0001>
module attributes {stable_mosaic.version = 11 : i64} {
  func.func @_per_pixel_kernel(%arg0: i32, %arg1: i32, %arg2: memref<8x256xf32, #tpu.memory_space<vmem>>, %arg3: memref<8x8x1xf32, #tpu.memory_space<vmem>>, %arg4: memref<8x8x1xf32, #tpu.memory_space<vmem>>, %arg5: memref<8x8x256xf32, #tpu.memory_space<vmem>>) attributes {dimension_semantics = [#tpu.dimension_semantics<parallel>, #tpu.dimension_semantics<parallel>], iteration_bounds = array<i64: 1, 1>, scalar_prefetch = 0 : i64, scratch_operands = 0 : i64, tpu.core_type = #tpu.core_type<tc>, window_params = [{transform_indices = @transform_0, window_bounds = array<i64: 8, 256>}, {transform_indices = @transform_1, window_bounds = array<i64: 8, 8, 1>}, {transform_indices = @transform_2, window_bounds = array<i64: 8, 8, 1>}, {transform_indices = @transform_3, window_bounds = array<i64: 8, 8, 256>}]} {
    %c0 = arith.constant 0 : index
    %c0_0 = arith.constant 0 : index
    %0 = vector.load %arg2[%c0, %c0_0] : memref<8x256xf32, #tpu.memory_space<vmem>>, vector<1x256xf32>
    %c0_1 = arith.constant 0 : index
    %c0_2 = arith.constant 0 : index
    %c0_3 = arith.constant 0 : index
    %1 = vector.load %arg3[%c0_1, %c0_2, %c0_3] : memref<8x8x1xf32, #tpu.memory_space<vmem>>, vector<1x8x1xf32>
    %2 = vector.shape_cast %1 : vector<1x8x1xf32> to vector<8x1xf32>
    %c0_4 = arith.constant 0 : index
    %c0_5 = arith.constant 0 : index
    %c0_6 = arith.constant 0 : index
    %3 = vector.load %arg4[%c0_4, %c0_5, %c0_6] : memref<8x8x1xf32, #tpu.memory_space<vmem>>, vector<1x8x1xf32>
    %4 = vector.shape_cast %3 : vector<1x8x1xf32> to vector<8x1xf32>
    %5 = vector.broadcast %2 : vector<8x1xf32> to vector<8x256xf32>
    %6 = vector.broadcast %0 : vector<1x256xf32> to vector<8x256xf32>
    %7 = arith.mulf %5, %6 : vector<8x256xf32>
    %8 = vector.broadcast %4 : vector<8x1xf32> to vector<8x256xf32>
    %9 = arith.addf %7, %8 : vector<8x256xf32>
    %cst = arith.constant dense<0xFF800000> : vector<256xf32>
    %10 = vector.multi_reduction <maximumf>, %9, %cst [0] : vector<8x256xf32> to vector<256xf32>
    %11 = vector.shape_cast %10 : vector<256xf32> to vector<1x256xf32>
    %12 = vector.broadcast %11 : vector<1x256xf32> to vector<8x256xf32>
    %13 = arith.subf %9, %12 : vector<8x256xf32>
    %14 = math.exp %13 : vector<8x256xf32>
    %cst_7 = arith.constant dense<0.000000e+00> : vector<256xf32>
    %15 = vector.multi_reduction <add>, %14, %cst_7 [0] : vector<8x256xf32> to vector<256xf32>
    %16 = vector.shape_cast %15 : vector<256xf32> to vector<1x256xf32>
    %17 = math.log %16 : vector<1x256xf32>
    %18 = arith.addf %11, %17 : vector<1x256xf32>
    %19 = vector.broadcast %18 : vector<1x256xf32> to vector<8x256xf32>
    %20 = arith.subf %9, %19 : vector<8x256xf32>
    %c0_8 = arith.constant 0 : index
    %c0_9 = arith.constant 0 : index
    %c0_10 = arith.constant 0 : index
    %21 = vector.load %arg5[%c0_8, %c0_9, %c0_10] : memref<8x8x256xf32, #tpu.memory_space<vmem>>, vector<1x8x256xf32>
    %22 = vector.shape_cast %21 : vector<1x8x256xf32> to vector<8x256xf32>
    %23 = vector.shape_cast %20 : vector<8x256xf32> to vector<1x8x256xf32>
    tpu.vector_store %arg5[%c0_8, %c0_9, %c0_10], %23 {strides = array<i32>} : memref<8x8x256xf32, #tpu.memory_space<vmem>>, vector<1x8x256xf32>,
    %c1 = arith.constant 1 : index
    %c0_11 = arith.constant 0 : index
    %24 = vector.load %arg2[%c1, %c0_11] : memref<8x256xf32, #tpu.memory_space<vmem>>, vector<1x256xf32>
    %c1_12 = arith.constant 1 : index
    %c0_13 = arith.constant 0 : index
    %c0_14 = arith.constant 0 : index
    %25 = vector.load %arg3[%c1_12, %c0_13, %c0_14] : memref<8x8x1xf32, #tpu.memory_space<vmem>>, vector<1x8x1xf32>
    %26 = vector.shape_cast %25 : vector<1x8x1xf32> to vector<8x1xf32>
    %c1_15 = arith.constant 1 : index
    %c0_16 = arith.constant 0 : index
    %c0_17 = arith.constant 0 : index
    %27 = vector.load %arg4[%c1_15, %c0_16, %c0_17] : memref<8x8x1xf32, #tpu.memory_space<vmem>>, vector<1x8x1xf32>
    %28 = vector.shape_cast %27 : vector<1x8x1xf32> to vector<8x1xf32>
    %29 = vector.broadcast %26 : vector<8x1xf32> to vector<8x256xf32>
    %30 = vector.broadcast %24 : vector<1x256xf32> to vector<8x256xf32>
    %31 = arith.mulf %29, %30 : vector<8x256xf32>
    %32 = vector.broadcast %28 : vector<8x1xf32> to vector<8x256xf32>
    %33 = arith.addf %31, %32 : vector<8x256xf32>
    %cst_18 = arith.constant dense<0xFF800000> : vector<256xf32>
    %34 = vector.multi_reduction <maximumf>, %33, %cst_18 [0] : vector<8x256xf32> to vector<256xf32>
    %35 = vector.shape_cast %34 : vector<256xf32> to vector<1x256xf32>
    %36 = vector.broadcast %35 : vector<1x256xf32> to vector<8x256xf32>
    %37 = arith.subf %33, %36 : vector<8x256xf32>
    %38 = math.exp %37 : vector<8x256xf32>
    %cst_19 = arith.constant dense<0.000000e+00> : vector<256xf32>
    %39 = vector.multi_reduction <add>, %38, %cst_19 [0] : vector<8x256xf32> to vector<256xf32>
    %40 = vector.shape_cast %39 : vector<256xf32> to vector<1x256xf32>
    %41 = math.log %40 : vector<1x256xf32>
    %42 = arith.addf %35, %41 : vector<1x256xf32>
    %43 = vector.broadcast %42 : vector<1x256xf32> to vector<8x256xf32>
    %44 = arith.subf %33, %43 : vector<8x256xf32>
    %c1_20 = arith.constant 1 : index
    %c0_21 = arith.constant 0 : index
    %c0_22 = arith.constant 0 : index
    %45 = vector.load %arg5[%c1_20, %c0_21, %c0_22] : memref<8x8x256xf32, #tpu.memory_space<vmem>>, vector<1x8x256xf32>
    %46 = vector.shape_cast %45 : vector<1x8x256xf32> to vector<8x256xf32>
    %47 = vector.shape_cast %44 : vector<8x256xf32> to vector<1x8x256xf32>
    tpu.vector_store %arg5[%c1_20, %c0_21, %c0_22], %47 {strides = array<i32>} : memref<8x8x256xf32, #tpu.memory_space<vmem>>, vector<1x8x256xf32>,
    %c2 = arith.constant 2 : index
    %c0_23 = arith.constant 0 : index
    %48 = vector.load %arg2[%c2, %c0_23] : memref<8x256xf32, #tpu.memory_space<vmem>>, vector<1x256xf32>
    %c2_24 = arith.constant 2 : index
    %c0_25 = arith.constant 0 : index
    %c0_26 = arith.constant 0 : index
    %49 = vector.load %arg3[%c2_24, %c0_25, %c0_26] : memref<8x8x1xf32, #tpu.memory_space<vmem>>, vector<1x8x1xf32>
    %50 = vector.shape_cast %49 : vector<1x8x1xf32> to vector<8x1xf32>
    %c2_27 = arith.constant 2 : index
    %c0_28 = arith.constant 0 : index
    %c0_29 = arith.constant 0 : index
    %51 = vector.load %arg4[%c2_27, %c0_28, %c0_29] : memref<8x8x1xf32, #tpu.memory_space<vmem>>, vector<1x8x1xf32>
    %52 = vector.shape_cast %51 : vector<1x8x1xf32> to vector<8x1xf32>
    %53 = vector.broadcast %50 : vector<8x1xf32> to vector<8x256xf32>
    %54 = vector.broadcast %48 : vector<1x256xf32> to vector<8x256xf32>
    %55 = arith.mulf %53, %54 : vector<8x256xf32>
    %56 = vector.broadcast %52 : vector<8x1xf32> to vector<8x256xf32>
    %57 = arith.addf %55, %56 : vector<8x256xf32>
    %cst_30 = arith.constant dense<0xFF800000> : vector<256xf32>
    %58 = vector.multi_reduction <maximumf>, %57, %cst_30 [0] : vector<8x256xf32> to vector<256xf32>
    %59 = vector.shape_cast %58 : vector<256xf32> to vector<1x256xf32>
    %60 = vector.broadcast %59 : vector<1x256xf32> to vector<8x256xf32>
    %61 = arith.subf %57, %60 : vector<8x256xf32>
    %62 = math.exp %61 : vector<8x256xf32>
    %cst_31 = arith.constant dense<0.000000e+00> : vector<256xf32>
    %63 = vector.multi_reduction <add>, %62, %cst_31 [0] : vector<8x256xf32> to vector<256xf32>
    %64 = vector.shape_cast %63 : vector<256xf32> to vector<1x256xf32>
    %65 = math.log %64 : vector<1x256xf32>
    %66 = arith.addf %59, %65 : vector<1x256xf32>
    %67 = vector.broadcast %66 : vector<1x256xf32> to vector<8x256xf32>
    %68 = arith.subf %57, %67 : vector<8x256xf32>
    %c2_32 = arith.constant 2 : index
    %c0_33 = arith.constant 0 : index
    %c0_34 = arith.constant 0 : index
    %69 = vector.load %arg5[%c2_32, %c0_33, %c0_34] : memref<8x8x256xf32, #tpu.memory_space<vmem>>, vector<1x8x256xf32>
    %70 = vector.shape_cast %69 : vector<1x8x256xf32> to vector<8x256xf32>
    %71 = vector.shape_cast %68 : vector<8x256xf32> to vector<1x8x256xf32>
    tpu.vector_store %arg5[%c2_32, %c0_33, %c0_34], %71 {strides = array<i32>} : memref<8x8x256xf32, #tpu.memory_space<vmem>>, vector<1x8x256xf32>,
    %c3 = arith.constant 3 : index
    %c0_35 = arith.constant 0 : index
    %72 = vector.load %arg2[%c3, %c0_35] : memref<8x256xf32, #tpu.memory_space<vmem>>, vector<1x256xf32>
    %c3_36 = arith.constant 3 : index
    %c0_37 = arith.constant 0 : index
    %c0_38 = arith.constant 0 : index
    %73 = vector.load %arg3[%c3_36, %c0_37, %c0_38] : memref<8x8x1xf32, #tpu.memory_space<vmem>>, vector<1x8x1xf32>
    %74 = vector.shape_cast %73 : vector<1x8x1xf32> to vector<8x1xf32>
    %c3_39 = arith.constant 3 : index
    %c0_40 = arith.constant 0 : index
    %c0_41 = arith.constant 0 : index
    %75 = vector.load %arg4[%c3_39, %c0_40, %c0_41] : memref<8x8x1xf32, #tpu.memory_space<vmem>>, vector<1x8x1xf32>
    %76 = vector.shape_cast %75 : vector<1x8x1xf32> to vector<8x1xf32>
    %77 = vector.broadcast %74 : vector<8x1xf32> to vector<8x256xf32>
    %78 = vector.broadcast %72 : vector<1x256xf32> to vector<8x256xf32>
    %79 = arith.mulf %77, %78 : vector<8x256xf32>
    %80 = vector.broadcast %76 : vector<8x1xf32> to vector<8x256xf32>
    %81 = arith.addf %79, %80 : vector<8x256xf32>
    %cst_42 = arith.constant dense<0xFF800000> : vector<256xf32>
    %82 = vector.multi_reduction <maximumf>, %81, %cst_42 [0] : vector<8x256xf32> to vector<256xf32>
    %83 = vector.shape_cast %82 : vector<256xf32> to vector<1x256xf32>
    %84 = vector.broadcast %83 : vector<1x256xf32> to vector<8x256xf32>
    %85 = arith.subf %81, %84 : vector<8x256xf32>
    %86 = math.exp %85 : vector<8x256xf32>
    %cst_43 = arith.constant dense<0.000000e+00> : vector<256xf32>
    %87 = vector.multi_reduction <add>, %86, %cst_43 [0] : vector<8x256xf32> to vector<256xf32>
    %88 = vector.shape_cast %87 : vector<256xf32> to vector<1x256xf32>
    %89 = math.log %88 : vector<1x256xf32>
    %90 = arith.addf %83, %89 : vector<1x256xf32>
    %91 = vector.broadcast %90 : vector<1x256xf32> to vector<8x256xf32>
    %92 = arith.subf %81, %91 : vector<8x256xf32>
    %c3_44 = arith.constant 3 : index
    %c0_45 = arith.constant 0 : index
    %c0_46 = arith.constant 0 : index
    %93 = vector.load %arg5[%c3_44, %c0_45, %c0_46] : memref<8x8x256xf32, #tpu.memory_space<vmem>>, vector<1x8x256xf32>
    %94 = vector.shape_cast %93 : vector<1x8x256xf32> to vector<8x256xf32>
    %95 = vector.shape_cast %92 : vector<8x256xf32> to vector<1x8x256xf32>
    tpu.vector_store %arg5[%c3_44, %c0_45, %c0_46], %95 {strides = array<i32>} : memref<8x8x256xf32, #tpu.memory_space<vmem>>, vector<1x8x256xf32>,
    %c4 = arith.constant 4 : index
    %c0_47 = arith.constant 0 : index
    %96 = vector.load %arg2[%c4, %c0_47] : memref<8x256xf32, #tpu.memory_space<vmem>>, vector<1x256xf32>
    %c4_48 = arith.constant 4 : index
    %c0_49 = arith.constant 0 : index
    %c0_50 = arith.constant 0 : index
    %97 = vector.load %arg3[%c4_48, %c0_49, %c0_50] : memref<8x8x1xf32, #tpu.memory_space<vmem>>, vector<1x8x1xf32>
    %98 = vector.shape_cast %97 : vector<1x8x1xf32> to vector<8x1xf32>
    %c4_51 = arith.constant 4 : index
    %c0_52 = arith.constant 0 : index
    %c0_53 = arith.constant 0 : index
    %99 = vector.load %arg4[%c4_51, %c0_52, %c0_53] : memref<8x8x1xf32, #tpu.memory_space<vmem>>, vector<1x8x1xf32>
    %100 = vector.shape_cast %99 : vector<1x8x1xf32> to vector<8x1xf32>
    %101 = vector.broadcast %98 : vector<8x1xf32> to vector<8x256xf32>
    %102 = vector.broadcast %96 : vector<1x256xf32> to vector<8x256xf32>
    %103 = arith.mulf %101, %102 : vector<8x256xf32>
    %104 = vector.broadcast %100 : vector<8x1xf32> to vector<8x256xf32>
    %105 = arith.addf %103, %104 : vector<8x256xf32>
    %cst_54 = arith.constant dense<0xFF800000> : vector<256xf32>
    %106 = vector.multi_reduction <maximumf>, %105, %cst_54 [0] : vector<8x256xf32> to vector<256xf32>
    %107 = vector.shape_cast %106 : vector<256xf32> to vector<1x256xf32>
    %108 = vector.broadcast %107 : vector<1x256xf32> to vector<8x256xf32>
    %109 = arith.subf %105, %108 : vector<8x256xf32>
    %110 = math.exp %109 : vector<8x256xf32>
    %cst_55 = arith.constant dense<0.000000e+00> : vector<256xf32>
    %111 = vector.multi_reduction <add>, %110, %cst_55 [0] : vector<8x256xf32> to vector<256xf32>
    %112 = vector.shape_cast %111 : vector<256xf32> to vector<1x256xf32>
    %113 = math.log %112 : vector<1x256xf32>
    %114 = arith.addf %107, %113 : vector<1x256xf32>
    %115 = vector.broadcast %114 : vector<1x256xf32> to vector<8x256xf32>
    %116 = arith.subf %105, %115 : vector<8x256xf32>
    %c4_56 = arith.constant 4 : index
    %c0_57 = arith.constant 0 : index
    %c0_58 = arith.constant 0 : index
    %117 = vector.load %arg5[%c4_56, %c0_57, %c0_58] : memref<8x8x256xf32, #tpu.memory_space<vmem>>, vector<1x8x256xf32>
    %118 = vector.shape_cast %117 : vector<1x8x256xf32> to vector<8x256xf32>
    %119 = vector.shape_cast %116 : vector<8x256xf32> to vector<1x8x256xf32>
    tpu.vector_store %arg5[%c4_56, %c0_57, %c0_58], %119 {strides = array<i32>} : memref<8x8x256xf32, #tpu.memory_space<vmem>>, vector<1x8x256xf32>,
    %c5 = arith.constant 5 : index
    %c0_59 = arith.constant 0 : index
    %120 = vector.load %arg2[%c5, %c0_59] : memref<8x256xf32, #tpu.memory_space<vmem>>, vector<1x256xf32>
    %c5_60 = arith.constant 5 : index
    %c0_61 = arith.constant 0 : index
    %c0_62 = arith.constant 0 : index
    %121 = vector.load %arg3[%c5_60, %c0_61, %c0_62] : memref<8x8x1xf32, #tpu.memory_space<vmem>>, vector<1x8x1xf32>
    %122 = vector.shape_cast %121 : vector<1x8x1xf32> to vector<8x1xf32>
    %c5_63 = arith.constant 5 : index
    %c0_64 = arith.constant 0 : index
    %c0_65 = arith.constant 0 : index
    %123 = vector.load %arg4[%c5_63, %c0_64, %c0_65] : memref<8x8x1xf32, #tpu.memory_space<vmem>>, vector<1x8x1xf32>
    %124 = vector.shape_cast %123 : vector<1x8x1xf32> to vector<8x1xf32>
    %125 = vector.broadcast %122 : vector<8x1xf32> to vector<8x256xf32>
    %126 = vector.broadcast %120 : vector<1x256xf32> to vector<8x256xf32>
    %127 = arith.mulf %125, %126 : vector<8x256xf32>
    %128 = vector.broadcast %124 : vector<8x1xf32> to vector<8x256xf32>
    %129 = arith.addf %127, %128 : vector<8x256xf32>
    %cst_66 = arith.constant dense<0xFF800000> : vector<256xf32>
    %130 = vector.multi_reduction <maximumf>, %129, %cst_66 [0] : vector<8x256xf32> to vector<256xf32>
    %131 = vector.shape_cast %130 : vector<256xf32> to vector<1x256xf32>
    %132 = vector.broadcast %131 : vector<1x256xf32> to vector<8x256xf32>
    %133 = arith.subf %129, %132 : vector<8x256xf32>
    %134 = math.exp %133 : vector<8x256xf32>
    %cst_67 = arith.constant dense<0.000000e+00> : vector<256xf32>
    %135 = vector.multi_reduction <add>, %134, %cst_67 [0] : vector<8x256xf32> to vector<256xf32>
    %136 = vector.shape_cast %135 : vector<256xf32> to vector<1x256xf32>
    %137 = math.log %136 : vector<1x256xf32>
    %138 = arith.addf %131, %137 : vector<1x256xf32>
    %139 = vector.broadcast %138 : vector<1x256xf32> to vector<8x256xf32>
    %140 = arith.subf %129, %139 : vector<8x256xf32>
    %c5_68 = arith.constant 5 : index
    %c0_69 = arith.constant 0 : index
    %c0_70 = arith.constant 0 : index
    %141 = vector.load %arg5[%c5_68, %c0_69, %c0_70] : memref<8x8x256xf32, #tpu.memory_space<vmem>>, vector<1x8x256xf32>
    %142 = vector.shape_cast %141 : vector<1x8x256xf32> to vector<8x256xf32>
    %143 = vector.shape_cast %140 : vector<8x256xf32> to vector<1x8x256xf32>
    tpu.vector_store %arg5[%c5_68, %c0_69, %c0_70], %143 {strides = array<i32>} : memref<8x8x256xf32, #tpu.memory_space<vmem>>, vector<1x8x256xf32>,
    %c6 = arith.constant 6 : index
    %c0_71 = arith.constant 0 : index
    %144 = vector.load %arg2[%c6, %c0_71] : memref<8x256xf32, #tpu.memory_space<vmem>>, vector<1x256xf32>
    %c6_72 = arith.constant 6 : index
    %c0_73 = arith.constant 0 : index
    %c0_74 = arith.constant 0 : index
    %145 = vector.load %arg3[%c6_72, %c0_73, %c0_74] : memref<8x8x1xf32, #tpu.memory_space<vmem>>, vector<1x8x1xf32>
    %146 = vector.shape_cast %145 : vector<1x8x1xf32> to vector<8x1xf32>
    %c6_75 = arith.constant 6 : index
    %c0_76 = arith.constant 0 : index
    %c0_77 = arith.constant 0 : index
    %147 = vector.load %arg4[%c6_75, %c0_76, %c0_77] : memref<8x8x1xf32, #tpu.memory_space<vmem>>, vector<1x8x1xf32>
    %148 = vector.shape_cast %147 : vector<1x8x1xf32> to vector<8x1xf32>
    %149 = vector.broadcast %146 : vector<8x1xf32> to vector<8x256xf32>
    %150 = vector.broadcast %144 : vector<1x256xf32> to vector<8x256xf32>
    %151 = arith.mulf %149, %150 : vector<8x256xf32>
    %152 = vector.broadcast %148 : vector<8x1xf32> to vector<8x256xf32>
    %153 = arith.addf %151, %152 : vector<8x256xf32>
    %cst_78 = arith.constant dense<0xFF800000> : vector<256xf32>
    %154 = vector.multi_reduction <maximumf>, %153, %cst_78 [0] : vector<8x256xf32> to vector<256xf32>
    %155 = vector.shape_cast %154 : vector<256xf32> to vector<1x256xf32>
    %156 = vector.broadcast %155 : vector<1x256xf32> to vector<8x256xf32>
    %157 = arith.subf %153, %156 : vector<8x256xf32>
    %158 = math.exp %157 : vector<8x256xf32>
    %cst_79 = arith.constant dense<0.000000e+00> : vector<256xf32>
    %159 = vector.multi_reduction <add>, %158, %cst_79 [0] : vector<8x256xf32> to vector<256xf32>
    %160 = vector.shape_cast %159 : vector<256xf32> to vector<1x256xf32>
    %161 = math.log %160 : vector<1x256xf32>
    %162 = arith.addf %155, %161 : vector<1x256xf32>
    %163 = vector.broadcast %162 : vector<1x256xf32> to vector<8x256xf32>
    %164 = arith.subf %153, %163 : vector<8x256xf32>
    %c6_80 = arith.constant 6 : index
    %c0_81 = arith.constant 0 : index
    %c0_82 = arith.constant 0 : index
    %165 = vector.load %arg5[%c6_80, %c0_81, %c0_82] : memref<8x8x256xf32, #tpu.memory_space<vmem>>, vector<1x8x256xf32>
    %166 = vector.shape_cast %165 : vector<1x8x256xf32> to vector<8x256xf32>
    %167 = vector.shape_cast %164 : vector<8x256xf32> to vector<1x8x256xf32>
    tpu.vector_store %arg5[%c6_80, %c0_81, %c0_82], %167 {strides = array<i32>} : memref<8x8x256xf32, #tpu.memory_space<vmem>>, vector<1x8x256xf32>,
    %c7 = arith.constant 7 : index
    %c0_83 = arith.constant 0 : index
    %168 = vector.load %arg2[%c7, %c0_83] : memref<8x256xf32, #tpu.memory_space<vmem>>, vector<1x256xf32>
    %c7_84 = arith.constant 7 : index
    %c0_85 = arith.constant 0 : index
    %c0_86 = arith.constant 0 : index
    %169 = vector.load %arg3[%c7_84, %c0_85, %c0_86] : memref<8x8x1xf32, #tpu.memory_space<vmem>>, vector<1x8x1xf32>
    %170 = vector.shape_cast %169 : vector<1x8x1xf32> to vector<8x1xf32>
    %c7_87 = arith.constant 7 : index
    %c0_88 = arith.constant 0 : index
    %c0_89 = arith.constant 0 : index
    %171 = vector.load %arg4[%c7_87, %c0_88, %c0_89] : memref<8x8x1xf32, #tpu.memory_space<vmem>>, vector<1x8x1xf32>
    %172 = vector.shape_cast %171 : vector<1x8x1xf32> to vector<8x1xf32>
    %173 = vector.broadcast %170 : vector<8x1xf32> to vector<8x256xf32>
    %174 = vector.broadcast %168 : vector<1x256xf32> to vector<8x256xf32>
    %175 = arith.mulf %173, %174 : vector<8x256xf32>
    %176 = vector.broadcast %172 : vector<8x1xf32> to vector<8x256xf32>
    %177 = arith.addf %175, %176 : vector<8x256xf32>
    %cst_90 = arith.constant dense<0xFF800000> : vector<256xf32>
    %178 = vector.multi_reduction <maximumf>, %177, %cst_90 [0] : vector<8x256xf32> to vector<256xf32>
    %179 = vector.shape_cast %178 : vector<256xf32> to vector<1x256xf32>
    %180 = vector.broadcast %179 : vector<1x256xf32> to vector<8x256xf32>
    %181 = arith.subf %177, %180 : vector<8x256xf32>
    %182 = math.exp %181 : vector<8x256xf32>
    %cst_91 = arith.constant dense<0.000000e+00> : vector<256xf32>
    %183 = vector.multi_reduction <add>, %182, %cst_91 [0] : vector<8x256xf32> to vector<256xf32>
    %184 = vector.shape_cast %183 : vector<256xf32> to vector<1x256xf32>
    %185 = math.log %184 : vector<1x256xf32>
    %186 = arith.addf %179, %185 : vector<1x256xf32>
    %187 = vector.broadcast %186 : vector<1x256xf32> to vector<8x256xf32>
    %188 = arith.subf %177, %187 : vector<8x256xf32>
    %c7_92 = arith.constant 7 : index
    %c0_93 = arith.constant 0 : index
    %c0_94 = arith.constant 0 : index
    %189 = vector.load %arg5[%c7_92, %c0_93, %c0_94] : memref<8x8x256xf32, #tpu.memory_space<vmem>>, vector<1x8x256xf32>
    %190 = vector.shape_cast %189 : vector<1x8x256xf32> to vector<8x256xf32>
    %191 = vector.shape_cast %188 : vector<8x256xf32> to vector<1x8x256xf32>
    tpu.vector_store %arg5[%c7_92, %c0_93, %c0_94], %191 {strides = array<i32>} : memref<8x8x256xf32, #tpu.memory_space<vmem>>, vector<1x8x256xf32>,
    return
  }
  func.func @transform_0(%arg0: i32, %arg1: i32) -> (i32, i32) {
    %c0_i32 = arith.constant 0 : i32
    return %arg0, %arg1 : i32, i32
  }
  func.func @transform_1(%arg0: i32, %arg1: i32) -> (i32, i32, i32) {
    %c0_i32 = arith.constant 0 : i32
    %c0_i32_0 = arith.constant 0 : i32
    %c0_i32_1 = arith.constant 0 : i32
    return %arg0, %c0_i32, %c0_i32_0 : i32, i32, i32
  }
  func.func @transform_2(%arg0: i32, %arg1: i32) -> (i32, i32, i32) {
    %c0_i32 = arith.constant 0 : i32
    %c0_i32_0 = arith.constant 0 : i32
    %c0_i32_1 = arith.constant 0 : i32
    return %arg0, %c0_i32, %c0_i32_0 : i32, i32, i32
  }
  func.func @transform_3(%arg0: i32, %arg1: i32) -> (i32, i32, i32) {
    %c0_i32 = arith.constant 0 : i32
    %c0_i32_0 = arith.constant 0 : i32
    return %arg0, %c0_i32, %arg1 : i32, i32, i32
  }
}

</mosaic_0001>

<llo_original>
// kernel: per_pixel_prediction_block.1
$region0: #{per_pixel_prediction_block.1}
  #allocation0 [shape = 'u32[]', space=smem, size = 0x4, offset = 0x4, fixed_abs, tag = 'smem constant byte address 0x4 - core index']
  #allocation1 [shape = 'u32[144,128]{1,0:T(1,128)}', space=vmem, size = 0x12000, scoped, tag = 'internal scratch']
  %s0 = inlined_call_operand.vmem [shape: f32[8,256], index: 0, kind: input, shape index: {}]
  %s1 = inlined_call_operand.vmem [shape: f32[8,8,1], index: 1, kind: input, shape index: {}]
  %s2 = inlined_call_operand.vmem [shape: f32[8,8,1], index: 2, kind: input, shape index: {}]
  %s3 = inlined_call_operand.vmem [shape: f32[8,8,256], index: 3, kind: output, shape index: {}]
  %s4 = sld [smem:[#allocation0]]
  $region22: #{per_pixel_prediction_block.1} parent=0
    _
  %s6 = ssub.s32 1, %s4
  %s7 = scalar_select 0, %s6, %s4
  // Predicated region
  $region2: #{per_pixel_prediction_block.1} parent=0 // pred_check
    _
  $region3: #{per_pixel_prediction_block.1} parent=0 // pred_check_branch
    %9 = sbr.rel (0) target = $region5
  $region4: #{per_pixel_prediction_block.1} parent=0 // pred_region
    _
  $region5: #{per_pixel_prediction_block.1} parent=0 // pred_fallthru
    _
  // Predicated region
  $region6: #{per_pixel_prediction_block.1} parent=0 // pred_check
    _
  $region7: #{per_pixel_prediction_block.1} parent=0 // pred_check_branch
    %11 = sbr.rel (0) target = $region9
  $region8: #{per_pixel_prediction_block.1} parent=0 // pred_region
    _
  $region9: #{per_pixel_prediction_block.1} parent=0 // pred_fallthru
    _
  // Predicated region
  $region10: #{per_pixel_prediction_block.1} parent=0 // pred_check
    _
  $region11: #{per_pixel_prediction_block.1} parent=0 // pred_check_branch
    %13 = sbr.rel (0) target = $region13
  $region12: #{per_pixel_prediction_block.1} parent=0 // pred_region
    _
  $region13: #{per_pixel_prediction_block.1} parent=0 // pred_fallthru
    _
  %v14 = vld [vmem:[%s0] ss:$8 sm:$0x3]
  %v15 = vld [vmem:[%s1] sm:$0xff]
  %v16 = vld [vmem:[%s2] sm:$0xff]
  %18 = vset.pattern.permute.xlu0 0
  %19 = vperm.xlu0 %18, %v15
  %v20 = vpop.permute.xlu0 %19
  %v23 = vlaneseq
  %v24 = vshrl.u32 %v23, 7
  %v25 = vsub.s32 0, %v24
  %v26 = vrot.slane %v14, %v25
  %v27 = vlaneseq
  %v28 = vshrl.u32 %v27, 7
  %v29 = vsub.s32 1, %v28
  %v30 = vrot.slane %v14, %v29
  %v33 = vmul.f32 %v20, %v26
  %v34 = vmul.f32 %v20, %v30
  %36 = vset.pattern.permute.xlu0 0
  %37 = vperm.xlu0 %36, %v16
  %v38 = vpop.permute.xlu0 %37
  %v40 = vadd.f32 %v33, %v38
  %v41 = vadd.f32 %v34, %v38
  %v42 = vrot.slane %v40, 4
  %v43 = vmax.f32 %v40, %v42
  %v44 = vrot.slane %v43, 2
  %v45 = vmax.f32 %v43, %v44
  %v46 = vrot.slane %v45, 1
  %v47 = vmax.f32 %v45, %v46
  %v48 = vrot.slane %v41, 4
  %v49 = vmax.f32 %v41, %v48
  %v50 = vrot.slane %v49, 2
  %v51 = vmax.f32 %v49, %v50
  %v52 = vrot.slane %v51, 1
  %v53 = vmax.f32 %v51, %v52
  %v54 = vsub.f32 %v40, %v47
  %v55 = vsub.f32 %v41, %v53
  %v56 = vmul.f32 %v54, 1.442695
  %v57 = vpow.pop %v56
  %v58 = vmul.f32 %v55, 1.442695
  %v59 = vpow.pop %v58
  %v60 = vrot.slane %v57, 4
  %v61 = vadd.f32 %v57, %v60
  %v62 = vrot.slane %v61, 2
  %v63 = vadd.f32 %v61, %v62
  %v64 = vrot.slane %v63, 1
  %v65 = vadd.f32 %v63, %v64
  %v66 = vrot.slane %v59, 4
  %v67 = vadd.f32 %v59, %v66
  %v68 = vrot.slane %v67, 2
  %v69 = vadd.f32 %v67, %v68
  %v70 = vrot.slane %v69, 1
  %v71 = vadd.f32 %v69, %v70
  %v72 = vlog2.pop %v65
  %v73 = vmul.f32 %v72, 0.6931472
  %v74 = vlog2.pop %v71
  %v75 = vmul.f32 %v74, 0.6931472
  %v76 = vadd.f32 %v47, %v73
  %v77 = vadd.f32 %v53, %v75
  %v78 = vsub.f32 %v40, %v76
  %v79 = vsub.f32 %v41, %v77
  %80 = vst [vmem:[%s3] sm:$0xff] %v78
  %81 = vst [vmem:[%s3 + $0x8] sm:$0xff] %v79
  %s82 = scalar_lea.vmem %s0, 1
  %v83 = vld [vmem:[%s82] ss:$8 sm:$0x3]
  %s84 = scalar_lea.vmem %s1, 8
  %v85 = vld [vmem:[%s84] sm:$0xff]
  %s86 = scalar_lea.vmem %s2, 8
  %v87 = vld [vmem:[%s86] sm:$0xff]
  %89 = vset.pattern.permute.xlu0 0
  %90 = vperm.xlu0 %89, %v85
  %v91 = vpop.permute.xlu0 %90
  %v94 = vlaneseq
  %v95 = vshrl.u32 %v94, 7
  %v96 = vsub.s32 0, %v95
  %v97 = vrot.slane %v83, %v96
  %v98 = vlaneseq
  %v99 = vshrl.u32 %v98, 7
  %v100 = vsub.s32 1, %v99
  %v101 = vrot.slane %v83, %v100
  %v104 = vmul.f32 %v91, %v97
  %v105 = vmul.f32 %v91, %v101
  %107 = vset.pattern.permute.xlu0 0
  %108 = vperm.xlu0 %107, %v87
  %v109 = vpop.permute.xlu0 %108
  %v111 = vadd.f32 %v104, %v109
  %v112 = vadd.f32 %v105, %v109
  %v113 = vrot.slane %v111, 4
  %v114 = vmax.f32 %v111, %v113
  %v115 = vrot.slane %v114, 2
  %v116 = vmax.f32 %v114, %v115
  %v117 = vrot.slane %v116, 1
  %v118 = vmax.f32 %v116, %v117
  %v119 = vrot.slane %v112, 4
  %v120 = vmax.f32 %v112, %v119
  %v121 = vrot.slane %v120, 2
  %v122 = vmax.f32 %v120, %v121
  %v123 = vrot.slane %v122, 1
  %v124 = vmax.f32 %v122, %v123
  %v125 = vsub.f32 %v111, %v118
  %v126 = vsub.f32 %v112, %v124
  %v127 = vmul.f32 %v125, 1.442695
  %v128 = vpow.pop %v127
  %v129 = vmul.f32 %v126, 1.442695
  %v130 = vpow.pop %v129
  %v131 = vrot.slane %v128, 4
  %v132 = vadd.f32 %v128, %v131
  %v133 = vrot.slane %v132, 2
  %v134 = vadd.f32 %v132, %v133
  %v135 = vrot.slane %v134, 1
  %v136 = vadd.f32 %v134, %v135
  %v137 = vrot.slane %v130, 4
  %v138 = vadd.f32 %v130, %v137
  %v139 = vrot.slane %v138, 2
  %v140 = vadd.f32 %v138, %v139
  %v141 = vrot.slane %v140, 1
  %v142 = vadd.f32 %v140, %v141
  %v143 = vlog2.pop %v136
  %v144 = vmul.f32 %v143, 0.6931472
  %v145 = vlog2.pop %v142
  %v146 = vmul.f32 %v145, 0.6931472
  %v147 = vadd.f32 %v118, %v144
  %v148 = vadd.f32 %v124, %v146
  %v149 = vsub.f32 %v111, %v147
  %v150 = vsub.f32 %v112, %v148
  %s151 = scalar_lea.vmem %s3, 16
  %152 = vst [vmem:[%s151] sm:$0xff] %v149
  %153 = vst [vmem:[%s151 + $0x8] sm:$0xff] %v150
  %s154 = scalar_lea.vmem %s0, 2
  %v155 = vld [vmem:[%s154] ss:$8 sm:$0x3]
  %s156 = scalar_lea.vmem %s1, 16
  %v157 = vld [vmem:[%s156] sm:$0xff]
  %s158 = scalar_lea.vmem %s2, 16
  %v159 = vld [vmem:[%s158] sm:$0xff]
  %161 = vset.pattern.permute.xlu0 0
  %162 = vperm.xlu0 %161, %v157
  %v163 = vpop.permute.xlu0 %162
  %v166 = vlaneseq
  %v167 = vshrl.u32 %v166, 7
  %v168 = vsub.s32 0, %v167
  %v169 = vrot.slane %v155, %v168
  %v170 = vlaneseq
  %v171 = vshrl.u32 %v170, 7
  %v172 = vsub.s32 1, %v171
  %v173 = vrot.slane %v155, %v172
  %v176 = vmul.f32 %v163, %v169
  %v177 = vmul.f32 %v163, %v173
  %179 = vset.pattern.permute.xlu0 0
  %180 = vperm.xlu0 %179, %v159
  %v181 = vpop.permute.xlu0 %180
  %v183 = vadd.f32 %v176, %v181
  %v184 = vadd.f32 %v177, %v181
  %v185 = vrot.slane %v183, 4
  %v186 = vmax.f32 %v183, %v185
  %v187 = vrot.slane %v186, 2
  %v188 = vmax.f32 %v186, %v187
  %v189 = vrot.slane %v188, 1
  %v190 = vmax.f32 %v188, %v189
  %v191 = vrot.slane %v184, 4
  %v192 = vmax.f32 %v184, %v191
  %v193 = vrot.slane %v192, 2
  %v194 = vmax.f32 %v192, %v193
  %v195 = vrot.slane %v194, 1
  %v196 = vmax.f32 %v194, %v195
  %v197 = vsub.f32 %v183, %v190
  %v198 = vsub.f32 %v184, %v196
  %v199 = vmul.f32 %v197, 1.442695
  %v200 = vpow.pop %v199
  %v201 = vmul.f32 %v198, 1.442695
  %v202 = vpow.pop %v201
  %v203 = vrot.slane %v200, 4
  %v204 = vadd.f32 %v200, %v203
  %v205 = vrot.slane %v204, 2
  %v206 = vadd.f32 %v204, %v205
  %v207 = vrot.slane %v206, 1
  %v208 = vadd.f32 %v206, %v207
  %v209 = vrot.slane %v202, 4
  %v210 = vadd.f32 %v202, %v209
  %v211 = vrot.slane %v210, 2
  %v212 = vadd.f32 %v210, %v211
  %v213 = vrot.slane %v212, 1
  %v214 = vadd.f32 %v212, %v213
  %v215 = vlog2.pop %v208
  %v216 = vmul.f32 %v215, 0.6931472
  %v217 = vlog2.pop %v214
  %v218 = vmul.f32 %v217, 0.6931472
  %v219 = vadd.f32 %v190, %v216
  %v220 = vadd.f32 %v196, %v218
  %v221 = vsub.f32 %v183, %v219
  %v222 = vsub.f32 %v184, %v220
  %s223 = scalar_lea.vmem %s3, 32
  %224 = vst [vmem:[%s223] sm:$0xff] %v221
  %225 = vst [vmem:[%s223 + $0x8] sm:$0xff] %v222
  %s226 = scalar_lea.vmem %s0, 3
  %v227 = vld [vmem:[%s226] ss:$8 sm:$0x3]
  %s228 = scalar_lea.vmem %s1, 24
  %v229 = vld [vmem:[%s228] sm:$0xff]
  %s230 = scalar_lea.vmem %s2, 24
  %v231 = vld [vmem:[%s230] sm:$0xff]
  %233 = vset.pattern.permute.xlu0 0
  %234 = vperm.xlu0 %233, %v229
  %v235 = vpop.permute.xlu0 %234
  %v238 = vlaneseq
  %v239 = vshrl.u32 %v238, 7
  %v240 = vsub.s32 0, %v239
  %v241 = vrot.slane %v227, %v240
  %v242 = vlaneseq
  %v243 = vshrl.u32 %v242, 7
  %v244 = vsub.s32 1, %v243
  %v245 = vrot.slane %v227, %v244
  %v248 = vmul.f32 %v235, %v241
  %v249 = vmul.f32 %v235, %v245
  %251 = vset.pattern.permute.xlu0 0
  %252 = vperm.xlu0 %251, %v231
  %v253 = vpop.permute.xlu0 %252
  %v255 = vadd.f32 %v248, %v253
  %v256 = vadd.f32 %v249, %v253
  %v257 = vrot.slane %v255, 4
  %v258 = vmax.f32 %v255, %v257
  %v259 = vrot.slane %v258, 2
  %v260 = vmax.f32 %v258, %v259
  %v261 = vrot.slane %v260, 1
  %v262 = vmax.f32 %v260, %v261
  %v263 = vrot.slane %v256, 4
  %v264 = vmax.f32 %v256, %v263
  %v265 = vrot.slane %v264, 2
  %v266 = vmax.f32 %v264, %v265
  %v267 = vrot.slane %v266, 1
  %v268 = vmax.f32 %v266, %v267
  %v269 = vsub.f32 %v255, %v262
  %v270 = vsub.f32 %v256, %v268
  %v271 = vmul.f32 %v269, 1.442695
  %v272 = vpow.pop %v271
  %v273 = vmul.f32 %v270, 1.442695
  %v274 = vpow.pop %v273
  %v275 = vrot.slane %v272, 4
  %v276 = vadd.f32 %v272, %v275
  %v277 = vrot.slane %v276, 2
  %v278 = vadd.f32 %v276, %v277
  %v279 = vrot.slane %v278, 1
  %v280 = vadd.f32 %v278, %v279
  %v281 = vrot.slane %v274, 4
  %v282 = vadd.f32 %v274, %v281
  %v283 = vrot.slane %v282, 2
  %v284 = vadd.f32 %v282, %v283
  %v285 = vrot.slane %v284, 1
  %v286 = vadd.f32 %v284, %v285
  %v287 = vlog2.pop %v280
  %v288 = vmul.f32 %v287, 0.6931472
  %v289 = vlog2.pop %v286
  %v290 = vmul.f32 %v289, 0.6931472
  %v291 = vadd.f32 %v262, %v288
  %v292 = vadd.f32 %v268, %v290
  %v293 = vsub.f32 %v255, %v291
  %v294 = vsub.f32 %v256, %v292
  %s295 = scalar_lea.vmem %s3, 48
  %296 = vst [vmem:[%s295] sm:$0xff] %v293
  %297 = vst [vmem:[%s295 + $0x8] sm:$0xff] %v294
  %s298 = scalar_lea.vmem %s0, 4
  %v299 = vld [vmem:[%s298] ss:$8 sm:$0x3]
  %s300 = scalar_lea.vmem %s1, 32
  %v301 = vld [vmem:[%s300] sm:$0xff]
  %s302 = scalar_lea.vmem %s2, 32
  %v303 = vld [vmem:[%s302] sm:$0xff]
  %305 = vset.pattern.permute.xlu0 0
  %306 = vperm.xlu0 %305, %v301
  %v307 = vpop.permute.xlu0 %306
  %v310 = vlaneseq
  %v311 = vshrl.u32 %v310, 7
  %v312 = vsub.s32 0, %v311
  %v313 = vrot.slane %v299, %v312
  %v314 = vlaneseq
  %v315 = vshrl.u32 %v314, 7
  %v316 = vsub.s32 1, %v315
  %v317 = vrot.slane %v299, %v316
  %v320 = vmul.f32 %v307, %v313
  %v321 = vmul.f32 %v307, %v317
  %323 = vset.pattern.permute.xlu0 0
  %324 = vperm.xlu0 %323, %v303
  %v325 = vpop.permute.xlu0 %324
  %v327 = vadd.f32 %v320, %v325
  %v328 = vadd.f32 %v321, %v325
  %v329 = vrot.slane %v327, 4
  %v330 = vmax.f32 %v327, %v329
  %v331 = vrot.slane %v330, 2
  %v332 = vmax.f32 %v330, %v331
  %v333 = vrot.slane %v332, 1
  %v334 = vmax.f32 %v332, %v333
  %v335 = vrot.slane %v328, 4
  %v336 = vmax.f32 %v328, %v335
  %v337 = vrot.slane %v336, 2
  %v338 = vmax.f32 %v336, %v337
  %v339 = vrot.slane %v338, 1
  %v340 = vmax.f32 %v338, %v339
  %v341 = vsub.f32 %v327, %v334
  %v342 = vsub.f32 %v328, %v340
  %v343 = vmul.f32 %v341, 1.442695
  %v344 = vpow.pop %v343
  %v345 = vmul.f32 %v342, 1.442695
  %v346 = vpow.pop %v345
  %v347 = vrot.slane %v344, 4
  %v348 = vadd.f32 %v344, %v347
  %v349 = vrot.slane %v348, 2
  %v350 = vadd.f32 %v348, %v349
  %v351 = vrot.slane %v350, 1
  %v352 = vadd.f32 %v350, %v351
  %v353 = vrot.slane %v346, 4
  %v354 = vadd.f32 %v346, %v353
  %v355 = vrot.slane %v354, 2
  %v356 = vadd.f32 %v354, %v355
  %v357 = vrot.slane %v356, 1
  %v358 = vadd.f32 %v356, %v357
  %v359 = vlog2.pop %v352
  %v360 = vmul.f32 %v359, 0.6931472
  %v361 = vlog2.pop %v358
  %v362 = vmul.f32 %v361, 0.6931472
  %v363 = vadd.f32 %v334, %v360
  %v364 = vadd.f32 %v340, %v362
  %v365 = vsub.f32 %v327, %v363
  %v366 = vsub.f32 %v328, %v364
  %s367 = scalar_lea.vmem %s3, 64
  %368 = vst [vmem:[%s367] sm:$0xff] %v365
  %369 = vst [vmem:[%s367 + $0x8] sm:$0xff] %v366
  %s370 = scalar_lea.vmem %s0, 5
  %v371 = vld [vmem:[%s370] ss:$8 sm:$0x3]
  %s372 = scalar_lea.vmem %s1, 40
  %v373 = vld [vmem:[%s372] sm:$0xff]
  %s374 = scalar_lea.vmem %s2, 40
  %v375 = vld [vmem:[%s374] sm:$0xff]
  %377 = vset.pattern.permute.xlu0 0
  %378 = vperm.xlu0 %377, %v373
  %v379 = vpop.permute.xlu0 %378
  %v382 = vlaneseq
  %v383 = vshrl.u32 %v382, 7
  %v384 = vsub.s32 0, %v383
  %v385 = vrot.slane %v371, %v384
  %v386 = vlaneseq
  %v387 = vshrl.u32 %v386, 7
  %v388 = vsub.s32 1, %v387
  %v389 = vrot.slane %v371, %v388
  %v392 = vmul.f32 %v379, %v385
  %v393 = vmul.f32 %v379, %v389
  %395 = vset.pattern.permute.xlu0 0
  %396 = vperm.xlu0 %395, %v375
  %v397 = vpop.permute.xlu0 %396
  %v399 = vadd.f32 %v392, %v397
  %v400 = vadd.f32 %v393, %v397
  %v401 = vrot.slane %v399, 4
  %v402 = vmax.f32 %v399, %v401
  %v403 = vrot.slane %v402, 2
  %v404 = vmax.f32 %v402, %v403
  %v405 = vrot.slane %v404, 1
  %v406 = vmax.f32 %v404, %v405
  %v407 = vrot.slane %v400, 4
  %v408 = vmax.f32 %v400, %v407
  %v409 = vrot.slane %v408, 2
  %v410 = vmax.f32 %v408, %v409
  %v411 = vrot.slane %v410, 1
  %v412 = vmax.f32 %v410, %v411
  %v413 = vsub.f32 %v399, %v406
  %v414 = vsub.f32 %v400, %v412
  %v415 = vmul.f32 %v413, 1.442695
  %v416 = vpow.pop %v415
  %v417 = vmul.f32 %v414, 1.442695
  %v418 = vpow.pop %v417
  %v419 = vrot.slane %v416, 4
  %v420 = vadd.f32 %v416, %v419
  %v421 = vrot.slane %v420, 2
  %v422 = vadd.f32 %v420, %v421
  %v423 = vrot.slane %v422, 1
  %v424 = vadd.f32 %v422, %v423
  %v425 = vrot.slane %v418, 4
  %v426 = vadd.f32 %v418, %v425
  %v427 = vrot.slane %v426, 2
  %v428 = vadd.f32 %v426, %v427
  %v429 = vrot.slane %v428, 1
  %v430 = vadd.f32 %v428, %v429
  %v431 = vlog2.pop %v424
  %v432 = vmul.f32 %v431, 0.6931472
  %v433 = vlog2.pop %v430
  %v434 = vmul.f32 %v433, 0.6931472
  %v435 = vadd.f32 %v406, %v432
  %v436 = vadd.f32 %v412, %v434
  %v437 = vsub.f32 %v399, %v435
  %v438 = vsub.f32 %v400, %v436
  %s439 = scalar_lea.vmem %s3, 80
  %440 = vst [vmem:[%s439] sm:$0xff] %v437
  %441 = vst [vmem:[%s439 + $0x8] sm:$0xff] %v438
  %s442 = scalar_lea.vmem %s0, 6
  %v443 = vld [vmem:[%s442] ss:$8 sm:$0x3]
  %s444 = scalar_lea.vmem %s1, 48
  %v445 = vld [vmem:[%s444] sm:$0xff]
  %s446 = scalar_lea.vmem %s2, 48
  %v447 = vld [vmem:[%s446] sm:$0xff]
  %449 = vset.pattern.permute.xlu0 0
  %450 = vperm.xlu0 %449, %v445
  %v451 = vpop.permute.xlu0 %450
  %v454 = vlaneseq
  %v455 = vshrl.u32 %v454, 7
  %v456 = vsub.s32 0, %v455
  %v457 = vrot.slane %v443, %v456
  %v458 = vlaneseq
  %v459 = vshrl.u32 %v458, 7
  %v460 = vsub.s32 1, %v459
  %v461 = vrot.slane %v443, %v460
  %v464 = vmul.f32 %v451, %v457
  %v465 = vmul.f32 %v451, %v461
  %467 = vset.pattern.permute.xlu0 0
  %468 = vperm.xlu0 %467, %v447
  %v469 = vpop.permute.xlu0 %468
  %v471 = vadd.f32 %v464, %v469
  %v472 = vadd.f32 %v465, %v469
  %v473 = vrot.slane %v471, 4
  %v474 = vmax.f32 %v471, %v473
  %v475 = vrot.slane %v474, 2
  %v476 = vmax.f32 %v474, %v475
  %v477 = vrot.slane %v476, 1
  %v478 = vmax.f32 %v476, %v477
  %v479 = vrot.slane %v472, 4
  %v480 = vmax.f32 %v472, %v479
  %v481 = vrot.slane %v480, 2
  %v482 = vmax.f32 %v480, %v481
  %v483 = vrot.slane %v482, 1
  %v484 = vmax.f32 %v482, %v483
  %v485 = vsub.f32 %v471, %v478
  %v486 = vsub.f32 %v472, %v484
  %v487 = vmul.f32 %v485, 1.442695
  %v488 = vpow.pop %v487
  %v489 = vmul.f32 %v486, 1.442695
  %v490 = vpow.pop %v489
  %v491 = vrot.slane %v488, 4
  %v492 = vadd.f32 %v488, %v491
  %v493 = vrot.slane %v492, 2
  %v494 = vadd.f32 %v492, %v493
  %v495 = vrot.slane %v494, 1
  %v496 = vadd.f32 %v494, %v495
  %v497 = vrot.slane %v490, 4
  %v498 = vadd.f32 %v490, %v497
  %v499 = vrot.slane %v498, 2
  %v500 = vadd.f32 %v498, %v499
  %v501 = vrot.slane %v500, 1
  %v502 = vadd.f32 %v500, %v501
  %v503 = vlog2.pop %v496
  %v504 = vmul.f32 %v503, 0.6931472
  %v505 = vlog2.pop %v502
  %v506 = vmul.f32 %v505, 0.6931472
  %v507 = vadd.f32 %v478, %v504
  %v508 = vadd.f32 %v484, %v506
  %v509 = vsub.f32 %v471, %v507
  %v510 = vsub.f32 %v472, %v508
  %s511 = scalar_lea.vmem %s3, 96
  %512 = vst [vmem:[%s511] sm:$0xff] %v509
  %513 = vst [vmem:[%s511 + $0x8] sm:$0xff] %v510
  %s514 = scalar_lea.vmem %s0, 7
  %v515 = vld [vmem:[%s514] ss:$8 sm:$0x3]
  %s516 = scalar_lea.vmem %s1, 56
  %v517 = vld [vmem:[%s516] sm:$0xff]
  %s518 = scalar_lea.vmem %s2, 56
  %v519 = vld [vmem:[%s518] sm:$0xff]
  %521 = vset.pattern.permute.xlu0 0
  %522 = vperm.xlu0 %521, %v517
  %v523 = vpop.permute.xlu0 %522
  %v526 = vlaneseq
  %v527 = vshrl.u32 %v526, 7
  %v528 = vsub.s32 0, %v527
  %v529 = vrot.slane %v515, %v528
  %v530 = vlaneseq
  %v531 = vshrl.u32 %v530, 7
  %v532 = vsub.s32 1, %v531
  %v533 = vrot.slane %v515, %v532
  %v536 = vmul.f32 %v523, %v529
  %v537 = vmul.f32 %v523, %v533
  %539 = vset.pattern.permute.xlu0 0
  %540 = vperm.xlu0 %539, %v519
  %v541 = vpop.permute.xlu0 %540
  %v543 = vadd.f32 %v536, %v541
  %v544 = vadd.f32 %v537, %v541
  %v545 = vrot.slane %v543, 4
  %v546 = vmax.f32 %v543, %v545
  %v547 = vrot.slane %v546, 2
  %v548 = vmax.f32 %v546, %v547
  %v549 = vrot.slane %v548, 1
  %v550 = vmax.f32 %v548, %v549
  %v551 = vrot.slane %v544, 4
  %v552 = vmax.f32 %v544, %v551
  %v553 = vrot.slane %v552, 2
  %v554 = vmax.f32 %v552, %v553
  %v555 = vrot.slane %v554, 1
  %v556 = vmax.f32 %v554, %v555
  %v557 = vsub.f32 %v543, %v550
  %v558 = vsub.f32 %v544, %v556
  %v559 = vmul.f32 %v557, 1.442695
  %v560 = vpow.pop %v559
  %v561 = vmul.f32 %v558, 1.442695
  %v562 = vpow.pop %v561
  %v563 = vrot.slane %v560, 4
  %v564 = vadd.f32 %v560, %v563
  %v565 = vrot.slane %v564, 2
  %v566 = vadd.f32 %v564, %v565
  %v567 = vrot.slane %v566, 1
  %v568 = vadd.f32 %v566, %v567
  %v569 = vrot.slane %v562, 4
  %v570 = vadd.f32 %v562, %v569
  %v571 = vrot.slane %v570, 2
  %v572 = vadd.f32 %v570, %v571
  %v573 = vrot.slane %v572, 1
  %v574 = vadd.f32 %v572, %v573
  %v575 = vlog2.pop %v568
  %v576 = vmul.f32 %v575, 0.6931472
  %v577 = vlog2.pop %v574
  %v578 = vmul.f32 %v577, 0.6931472
  %v579 = vadd.f32 %v550, %v576
  %v580 = vadd.f32 %v556, %v578
  %v581 = vsub.f32 %v543, %v579
  %v582 = vsub.f32 %v544, %v580
  %s583 = scalar_lea.vmem %s3, 112
  %584 = vst [vmem:[%s583] sm:$0xff] %v581
  %585 = vst [vmem:[%s583 + $0x8] sm:$0xff] %v582
  // Predicated region
  $region14: #{per_pixel_prediction_block.1} parent=0 // pred_check
    _
  $region15: #{per_pixel_prediction_block.1} parent=0 // pred_check_branch
    %587 = sbr.rel (0) target = $region17
  $region16: #{per_pixel_prediction_block.1} parent=0 // pred_region
    _
  $region17: #{per_pixel_prediction_block.1} parent=0 // pred_fallthru
    _
  // Predicated region
  $region18: #{per_pixel_prediction_block.1} parent=0 // pred_check
    _
  $region19: #{per_pixel_prediction_block.1} parent=0 // pred_check_branch
    %589 = sbr.rel (0) target = $region21
  $region20: #{per_pixel_prediction_block.1} parent=0 // pred_region
    _
  $region21: #{per_pixel_prediction_block.1} parent=0 // pred_fallthru
    _

</llo_original>
